<compile_context>
chip_gen: v7x
topology: tpu7x:2x2x1
jax: 0.10.0
libtpu: 0.0.40
codegen_flags: <defaults>
</compile_context>

<pallas_src>
import functools
import math

import jax
import jax.numpy as jnp
from jax.experimental import pallas as pl
from jax.experimental.pallas import tpu as pltpu


def _size_embedder_kernel(t_ref, c_ref, w_ref, o_ref, *, half, hidden):
    """Single-block body: sinusoidal embed -> Linear -> SiLU -> Linear.

    t_ref : (N, 1)     f32
    c_ref : (3, W)     f32   row 0 = freqs[:half], row 1 = b1[:H], row 2 = b2[:H]
    w_ref : (F+H, H)   bf16  rows [0:half]=w1_cos, [half:F]=w1_sin, [F:F+H]=w2
    o_ref : (N, H)     f32
    """
    F = 2 * half

    # Unpack the constant slab (static slices on the ref view).
    freqs = c_ref[0:1, 0:half]          # (1, half)
    b1 = c_ref[1:2, 0:hidden]           # (1, H)
    b2 = c_ref[2:3, 0:hidden]           # (1, H)

    # Sinusoidal embedding.  Elementwise + transcendental math stays in f32.
    args = t_ref[...] * freqs           # (N, 1) * (1, half) -> (N, half)
    cos = jnp.cos(args)
    sin = jnp.sin(args)
    # F is even (256) so the module's odd-dim zero-pad branch never triggers.

    # Linear(F -> H) + SiLU, concat-free:
    #   [cos, sin] @ w1 == cos @ w1[:half] + sin @ w1[half:]
    # bf16 MXU operands, f32 accumulation.
    h = (
        jnp.dot(cos.astype(jnp.bfloat16), w_ref[0:half, :],
                preferred_element_type=jnp.float32)
        + jnp.dot(sin.astype(jnp.bfloat16), w_ref[half:F, :],
                  preferred_element_type=jnp.float32)
        + b1
    )
    h = h * jax.nn.sigmoid(h)           # SiLU in f32 (EUP)

    # Linear(H -> H)
    y = jnp.dot(h.astype(jnp.bfloat16), w_ref[F:F + hidden, :],
                preferred_element_type=jnp.float32) + b2
    o_ref[...] = y.astype(o_ref.dtype)


def size_embedder_pallas(t_flat, consts, w_packed, *, half, hidden):
    """t_flat: (N,) flattened size scalars -> (N, hidden) embeddings."""
    N = int(t_flat.shape[0])
    F = 2 * half
    H = hidden
    assert w_packed.shape == (F + H, H), w_packed.shape
    assert consts.shape[0] == 3 and consts.shape[1] >= max(half, H), consts.shape

    t2d = t_flat.reshape(N, 1).astype(jnp.float32)

    # Cost hint: memory-bound on the (bf16) weight fetch, compute is negligible.
    w_bytes = int(w_packed.size) * 2
    c_bytes = int(consts.size) * 4
    io_bytes = (N * 1 + N * H) * 4
    cost = pl.CostEstimate(
        flops=2 * N * (F * H + H * H),
        transcendentals=N * F + N * H,            # cos + sin, sigmoid
        bytes_accessed=w_bytes + c_bytes + io_bytes,
    )

    # Grid-less single block => no pipelining, so no double-buffer term.
    # Keep the scoped-VMEM request modest (v7x: 64 MiB VMEM / 32 MiB scoped per TC).
    act_bytes = (N * F + 3 * N * H) * 4           # args/cos/sin + h/y f32 slack
    vmem_needed = w_bytes + c_bytes + io_bytes + act_bytes
    vmem_limit = int(min(max(vmem_needed + (2 << 20), 4 << 20), 24 << 20))

    # Every BlockSpec covers the full array (full-dim blocks), so the (8,128)
    # divisibility constraint does not apply.
    return pl.pallas_call(
        functools.partial(_size_embedder_kernel, half=half, hidden=H),
        out_shape=jax.ShapeDtypeStruct((N, H), jnp.float32),
        in_specs=[
            pl.BlockSpec((N, 1), lambda: (0, 0)),
            pl.BlockSpec(consts.shape, lambda: (0, 0)),
            pl.BlockSpec(w_packed.shape, lambda: (0, 0)),
        ],
        out_specs=pl.BlockSpec((N, H), lambda: (0, 0)),
        compiler_params=pltpu.CompilerParams(vmem_limit_bytes=vmem_limit),
        cost_estimate=cost,
    )(t2d, consts, w_packed)


class SizeEmbedderParams:
    """Deterministic synthetic parameters mirroring the nn.Module __init__.

    All packing / casting happens ONCE here so repeated forward calls hand the
    kernel ready-made device slabs (3 input DMA descriptors per call, no
    per-step concat / pad / cast work).
    """

    def __init__(self, hidden_size, frequency_embedding_size=256, key=None):
        if key is None:
            key = jax.random.PRNGKey(0)
        k1, k2, k3, k4 = jax.random.split(key, 4)
        assert frequency_embedding_size % 2 == 0, "odd freq-embedding dim unsupported"
        self.hidden_size = hidden_size
        self.frequency_embedding_size = frequency_embedding_size
        F, H = frequency_embedding_size, hidden_size
        half = F // 2
        self.half = half

        # Stored as (in, out) = transpose of PyTorch's Linear weight (out, in).
        w1 = jax.random.normal(k1, (F, H), jnp.float32) * (1.0 / math.sqrt(F))
        w2 = jax.random.normal(k3, (H, H), jnp.float32) * (1.0 / math.sqrt(H))
        b1 = jax.random.normal(k2, (H,), jnp.float32) * 0.01
        b2 = jax.random.normal(k4, (H,), jnp.float32) * 0.01
        freqs = jnp.exp(
            -math.log(10000.0) * jnp.arange(half, dtype=jnp.float32) / half)

        # One bf16 weight slab (single DMA): [w1_cos ; w1_sin ; w2] on sublanes.
        self.w_packed = jnp.concatenate([w1, w2], axis=0).astype(jnp.bfloat16)

        # One f32 constant slab (single DMA): freqs / b1 / b2, lane-padded to W.
        W = max(half, H)
        consts = jnp.zeros((3, W), jnp.float32)
        consts = consts.at[0, :half].set(freqs)
        consts = consts.at[1, :H].set(b1)
        consts = consts.at[2, :H].set(b2)
        self.consts = consts


def size_embedder_forward(params, s, bs):
    """Mirrors SizeEmbedder.forward(s, bs)."""
    s = jnp.asarray(s)
    if s.ndim == 1:
        s = s[:, None]
    assert s.ndim == 2
    if s.shape[0] != bs:
        s = jnp.tile(s, (bs // s.shape[0], 1))
        assert s.shape[0] == bs
    b, dims = s.shape
    s_flat = s.reshape(b * dims)                              # 'b d -> (b d)'
    s_emb = size_embedder_pallas(
        s_flat, params.consts, params.w_packed,
        half=params.half, hidden=params.hidden_size)          # (b*d, H)
    return s_emb.reshape(b, dims * params.hidden_size)        # '(b d) d2 -> b (d d2)'


def _reference_forward(params, s, bs):
    """Pure-JAX reference with identical (bf16-weight, f32-accum) numerics."""
    s = jnp.asarray(s)
    if s.ndim == 1:
        s = s[:, None]
    if s.shape[0] != bs:
        s = jnp.tile(s, (bs // s.shape[0], 1))
    b, dims = s.shape
    half, H = params.half, params.hidden_size
    F = params.frequency_embedding_size
    freqs = params.consts[0, :half]
    b1 = params.consts[1, :H]
    b2 = params.consts[2, :H]
    w1c = params.w_packed[:half]
    w1s = params.w_packed[half:F]
    w2 = params.w_packed[F:F + H]

    t = s.reshape(b * dims).astype(jnp.float32)
    args = t[:, None] * freqs[None, :]                        # (N, F/2)
    cos, sin = jnp.cos(args), jnp.sin(args)
    h = (jnp.dot(cos.astype(jnp.bfloat16), w1c, preferred_element_type=jnp.float32)
         + jnp.dot(sin.astype(jnp.bfloat16), w1s, preferred_element_type=jnp.float32)
         + b1)
    h = h * jax.nn.sigmoid(h)
    y = jnp.dot(h.astype(jnp.bfloat16), w2, preferred_element_type=jnp.float32) + b2
    return y.reshape(b, dims * H)


if __name__ == "__main__":
    key = jax.random.PRNGKey(0)
    hidden_size = 32
    params = SizeEmbedderParams(hidden_size=hidden_size,
                                frequency_embedding_size=256,
                                key=key)

    # s: (1, 2) sizes (e.g. height/width), broadcast-repeated to batch bs=2.
    bs = 2
    s = jax.random.uniform(jax.random.PRNGKey(1), (1, 2), jnp.float32) * 64.0

    out = size_embedder_forward(params, s, bs)
    out = jax.block_until_ready(out)

    ref = _reference_forward(params, s, bs)
    assert out.shape == (bs, 2 * hidden_size), out.shape
    assert jnp.allclose(out, ref, atol=1e-2, rtol=1e-2), float(
        jnp.max(jnp.abs(out - ref)))
    print("KERNEL_OK")
</pallas_src>

<mosaic_0001>
module attributes {stable_mosaic.version = 11 : i64} {
  func.func @_size_embedder_kernel(%arg0: memref<4x1xf32, #tpu.memory_space<vmem>>, %arg1: memref<3x128xf32, #tpu.memory_space<vmem>>, %arg2: memref<288x32xbf16, #tpu.memory_space<vmem>>, %arg3: memref<4x32xf32, #tpu.memory_space<vmem>>) attributes {dimension_semantics = [], scalar_prefetch = 0 : i64, scratch_operands = 0 : i64, tpu.core_type = #tpu.core_type<tc>} {
    %c0 = arith.constant 0 : index
    %c0_0 = arith.constant 0 : index
    %0 = vector.load %arg1[%c0, %c0_0] : memref<3x128xf32, #tpu.memory_space<vmem>>, vector<1x128xf32>
    %c1 = arith.constant 1 : index
    %c0_1 = arith.constant 0 : index
    %1 = vector.load %arg1[%c1, %c0_1] : memref<3x128xf32, #tpu.memory_space<vmem>>, vector<1x32xf32>
    %c2 = arith.constant 2 : index
    %c0_2 = arith.constant 0 : index
    %2 = vector.load %arg1[%c2, %c0_2] : memref<3x128xf32, #tpu.memory_space<vmem>>, vector<1x32xf32>
    %c0_3 = arith.constant 0 : index
    %c0_4 = arith.constant 0 : index
    %3 = vector.load %arg0[%c0_3, %c0_4] : memref<4x1xf32, #tpu.memory_space<vmem>>, vector<4x1xf32>
    %4 = vector.broadcast %3 : vector<4x1xf32> to vector<4x128xf32>
    %5 = vector.broadcast %0 : vector<1x128xf32> to vector<4x128xf32>
    %6 = arith.mulf %4, %5 : vector<4x128xf32>
    %7 = math.cos %6 : vector<4x128xf32>
    %8 = math.sin %6 : vector<4x128xf32>
    %9 = arith.truncf %7 : vector<4x128xf32> to vector<4x128xbf16>
    %c0_5 = arith.constant 0 : index
    %c0_6 = arith.constant 0 : index
    %10 = vector.load %arg2[%c0_5, %c0_6] : memref<288x32xbf16, #tpu.memory_space<vmem>>, vector<128x32xbf16>
    %cst = arith.constant dense<0.000000e+00> : vector<4x32xf32>
    %11 = tpu.matmul %9, %10, %cst {dimension_numbers = #tpu.dot_dimension_numbers<[1], [0], [0], [1], [0, 0, 1, 1], [], []>} : vector<4x128xbf16>, vector<128x32xbf16>, vector<4x32xf32> -> vector<4x32xf32>
    %12 = arith.truncf %8 : vector<4x128xf32> to vector<4x128xbf16>
    %c128 = arith.constant 128 : index
    %c0_7 = arith.constant 0 : index
    %13 = vector.load %arg2[%c128, %c0_7] : memref<288x32xbf16, #tpu.memory_space<vmem>>, vector<128x32xbf16>
    %cst_8 = arith.constant dense<0.000000e+00> : vector<4x32xf32>
    %14 = tpu.matmul %12, %13, %cst_8 {dimension_numbers = #tpu.dot_dimension_numbers<[1], [0], [0], [1], [0, 0, 1, 1], [], []>} : vector<4x128xbf16>, vector<128x32xbf16>, vector<4x32xf32> -> vector<4x32xf32>
    %15 = arith.addf %11, %14 : vector<4x32xf32>
    %16 = vector.broadcast %1 : vector<1x32xf32> to vector<4x32xf32>
    %17 = arith.addf %15, %16 : vector<4x32xf32>
    %18 = arith.negf %17 : vector<4x32xf32>
    %19 = math.exp %18 : vector<4x32xf32>
    %cst_9 = arith.constant 1.000000e+00 : f32
    %20 = vector.broadcast %cst_9 : f32 to vector<4x32xf32>
    %21 = arith.addf %20, %19 : vector<4x32xf32>
    %22 = arith.divf %20, %21 : vector<4x32xf32>
    %23 = arith.mulf %17, %22 : vector<4x32xf32>
    %24 = arith.truncf %23 : vector<4x32xf32> to vector<4x32xbf16>
    %c256 = arith.constant 256 : index
    %c0_10 = arith.constant 0 : index
    %25 = vector.load %arg2[%c256, %c0_10] : memref<288x32xbf16, #tpu.memory_space<vmem>>, vector<32x32xbf16>
    %cst_11 = arith.constant dense<0.000000e+00> : vector<4x32xf32>
    %26 = tpu.matmul %24, %25, %cst_11 {dimension_numbers = #tpu.dot_dimension_numbers<[1], [0], [0], [1], [0, 0, 1, 1], [], []>} : vector<4x32xbf16>, vector<32x32xbf16>, vector<4x32xf32> -> vector<4x32xf32>
    %27 = vector.broadcast %2 : vector<1x32xf32> to vector<4x32xf32>
    %28 = arith.addf %26, %27 : vector<4x32xf32>
    %c0_12 = arith.constant 0 : index
    %c0_13 = arith.constant 0 : index
    %29 = vector.load %arg3[%c0_12, %c0_13] : memref<4x32xf32, #tpu.memory_space<vmem>>, vector<4x32xf32>
    tpu.vector_store %arg3[%c0_12, %c0_13], %28 {strides = array<i32>} : memref<4x32xf32, #tpu.memory_space<vmem>>, vector<4x32xf32>,
    return
  }
}

</mosaic_0001>

<llo_original>
// kernel: tpu_custom_call.1
$region0: #{tpu_custom_call.1}
  #allocation0 [shape = 'u32[]', space=smem, size = 0x4, offset = 0x4, fixed_abs, tag = 'smem constant byte address 0x4 - core index']
  #allocation1 [shape = 'u32[144,128]{1,0:T(1,128)}', space=vmem, size = 0x12000, scoped, tag = 'internal scratch']
  %s0 = inlined_call_operand.vmem [shape: f32[4,1], index: 0, kind: input, shape index: {}]
  %s1 = inlined_call_operand.vmem [shape: f32[3,128], index: 1, kind: input, shape index: {}]
  %s2 = inlined_call_operand.vmem [shape: bf16[288,32], index: 2, kind: input, shape index: {}]
  %s3 = inlined_call_operand.hbm [shape: f32[4,32], index: 3, kind: output, shape index: {}]
  %s4 = sld [smem:[#allocation0]]
  $region22: #{tpu_custom_call.1} parent=0
    _
  %s6 = ssub.s32 1, %s4
  %s7 = scalar_select 0, %s6, %s4
  $region1: #{tpu_custom_call.1} parent=0
    #allocation2 [shape = 'u8[2048]{0}', space=vmem, size = 0x800, scoped, tag = 'output window, operand 0, single buffered']
    #allocation3 [shape = 's32[1]{0}', space=sflag, size = 0x4, scoped, tag = 'scoped memory for tpu_custom_call.1']
    %8 = vsyncpa [#allocation3], 0
    // Predicated region
    $region2: #{tpu_custom_call.1} parent=1 // pred_check
      _
    $region3: #{tpu_custom_call.1} parent=1 // pred_check_branch
      %10 = sbr.rel (0) target = $region5
    $region4: #{tpu_custom_call.1} parent=1 // pred_region
      _
    $region5: #{tpu_custom_call.1} parent=1 // pred_fallthru
      _
    // Predicated region
    $region6: #{tpu_custom_call.1} parent=1 // pred_check
      _
    $region7: #{tpu_custom_call.1} parent=1 // pred_check_branch
      %12 = sbr.rel (0) target = $region9
    $region8: #{tpu_custom_call.1} parent=1 // pred_region
      _
    $region9: #{tpu_custom_call.1} parent=1 // pred_fallthru
      _
    // Predicated region
    $region10: #{tpu_custom_call.1} parent=1 // pred_check
      _
    $region11: #{tpu_custom_call.1} parent=1 // pred_check_branch
      %14 = sbr.rel (0) target = $region13
    $region12: #{tpu_custom_call.1} parent=1 // pred_region
      _
    $region13: #{tpu_custom_call.1} parent=1 // pred_fallthru
      _
    %v16 = vld [vmem:[%s1] sm:$0x1]
    %v17 = vld [vmem:[%s1 + $0x1] sm:$0x1]
    %v18 = vld [vmem:[%s1 + $0x2] sm:$0x1]
    %v19 = vld [vmem:[%s0] sm:$0xf]
    %21 = vset.pattern.permute.xlu0 0
    %22 = vperm.xlu0 %21, %v19
    %v23 = vpop.permute.xlu0 %22
    %v25 = vlaneseq
    %v26 = vshrl.u32 %v25, 7
    %v27 = vsub.s32 0, %v26
    %v28 = vrot.slane %v16, %v27
    %v29 = vmul.f32 %v23, %v28
    %v30 = vand.u32 2147483647, %v29
    %vm31 = vcmp.le.f32.partialorder %v30, 0.7853982
    %vm32 = vcmp.lt.s32.totalorder %v29, 0
    %v33 = vand.u32 %v29, 2139095040
    %v34 = vshrl.u32 %v33, 23
    %v35 = vsub.s32 %v34, 127
    %v36 = vand.u32 2147483647, %v29
    %v37 = vand.u32 %v36, 8388607
    %v38 = vor.u32 %v37, 8388608
    %v39 = vsub.s32 0, %v38
    %v40 = vadd.s32 %v35, 1
    %vm41 = vcmp.gt.s32.totalorder %v40, 0
    %v42 = vsel %vm41, %v40, 0
    %v43 = vshrl.u32 %v42, 5
    %v44 = vand.u32 %v42, 31
    %v45 = vsub.s32 32, %v44
    %v46 = vshrl.u32 683565275, %v45
    %v47 = vshll.u32 683565275, %v44
    %v48 = vshrl.u32 2475754826, %v45
    %v49 = vor.u32 %v47, %v48
    %v50 = vshll.u32 2475754826, %v44
    %v51 = vshrl.u32 2131351028, %v45
    %v52 = vor.u32 %v50, %v51
    %v53 = vshll.u32 2131351028, %v44
    %v54 = vshrl.u32 2102212464, %v45
    %v55 = vor.u32 %v53, %v54
    %v56 = vshll.u32 2102212464, %v44
    %v57 = vshrl.u32 920167782, %v45
    %v58 = vor.u32 %v56, %v57
    %v59 = vshll.u32 920167782, %v44
    %v60 = vshrl.u32 1326507024, %v45
    %v61 = vor.u32 %v59, %v60
    %vm62 = vcmp.lt.s32.totalorder %v43, 1
    %vm63 = vcmp.lt.s32.totalorder %v43, 2
    %vm64 = vcmp.lt.s32.totalorder %v43, 3
    %vm65 = vcmp.lt.s32.totalorder %v43, 4
    %v66 = vsel %vm62, %v46, %v49
    %v67 = vsel %vm65, %v55, 2102212464
    %v68 = vsel %vm64, %v52, %v67
    %v69 = vsel %vm63, %v66, %v68
    %v70 = vsel %vm62, %v49, %v52
    %v71 = vsel %vm65, %v58, 920167782
    %v72 = vsel %vm64, %v55, %v71
    %v73 = vsel %vm63, %v70, %v72
    %v74 = vsel %vm62, %v52, %v55
    %v75 = vsel %vm65, %v61, 1326507024
    %v76 = vsel %vm64, %v58, %v75
    %v77 = vsel %vm63, %v74, %v76
    %v78 = vshll.u32 %v38, 8
    %v79 = vmul.u32.u64.compose %v78, %v77
    %v80 = vextract.low.u32 %v79
    %v81 = vextract.high.u32 %v79
    %v82 = vmul.u32.u64.compose %v78, %v73
    %v83 = vextract.low.u32 %v82
    %v84 = vextract.high.u32 %v82
    %v85 = vmul.u32 %v78, %v69
    %v86 = vadd.s32 %v81, %v83
    %vm87 = vc.u32 %v81, %v83
    %v88 = vadd.s32 %v84, 1
    %v89 = vsel %vm87, %v88, %v84
    %v90 = vadd.s32 %v85, %v89
    %v91 = vadd.s32 %v90, 536870912
    %v92 = vshrl.u32 %v91, 30
    %v93 = vshll.u32 %v92, 30
    %v94 = vsub.s32 %v90, %v93
    %vm95 = vcmp.lt.s32.totalorder %v94, 0
    %v96 = vsub.s32 0, %v94
    %v97 = vsel %vm95, %v96, %v94
    %v98 = vclz %v97
    %v99 = vsub.s32 %v98, 2
    %vm100 = vcmp.gt.s32.totalorder 0, %v99
    %v101 = vsel %vm100, 0, %v99
    %v102 = vsub.s32 32, %v101
    %v103 = vshll.u32 %v94, %v101
    %v104 = vshrl.u32 %v86, %v102
    %v105 = vor.u32 %v103, %v104
    %v106 = vsub.s32 4294967266, %v101
    %v107 = vadd.s32 %v106, 127
    %v108 = vshll.u32 %v107, 23
    %v109 = vor.u32 4788187, %v108
    %v110 = vand.u32 2147483647, %v109
    %v112 = vcvt.s32.f32 %v105
    %v113 = vmul.f32 %v112, %v110
    %v114 = vxor.u32 %v113, 2147483648
    %v115 = vsel %vm32, %v114, %v113
    %v116 = vsub.s32 4, %v92
    %v117 = vsel %vm32, %v116, %v92
    %v118 = vsel %vm31, %v29, %v115
    %v119 = vsel %vm31, 0, %v117
    %v120 = vcosq.f32.pop %v118
    %v121 = vsinq.f32.pop %v118
    %vm122 = vweird.f32 %v29
    %v123 = vand.u32 %v119, 3
    %vm124 = vcmp.lt.s32.totalorder %v123, 2
    %vm125 = vcmp.eq.s32.totalorder %v123, 0
    %v126 = vxor.u32 %v121, 2147483648
    %v127 = vsel %vm125, %v120, %v126
    %vm128 = vcmp.eq.s32.totalorder %v123, 2
    %v129 = vxor.u32 %v120, 2147483648
    %v130 = vsel %vm128, %v129, %v121
    %v131 = vsel %vm124, %v127, %v130
    %v132 = vsel %vm122, nan, %v131
    %v133 = vand.u32 2147483647, %v29
    %vm134 = vcmp.le.f32.partialorder %v133, 0.7853982
    %vm135 = vcmp.lt.s32.totalorder %v29, 0
    %v136 = vand.u32 %v29, 2139095040
    %v137 = vshrl.u32 %v136, 23
    %v138 = vsub.s32 %v137, 127
    %v139 = vand.u32 2147483647, %v29
    %v140 = vand.u32 %v139, 8388607
    %v141 = vor.u32 %v140, 8388608
    %v142 = vsub.s32 0, %v141
    %v143 = vadd.s32 %v138, 1
    %vm144 = vcmp.gt.s32.totalorder %v143, 0
    %v145 = vsel %vm144, %v143, 0
    %v146 = vshrl.u32 %v145, 5
    %v147 = vand.u32 %v145, 31
    %v148 = vsub.s32 32, %v147
    %v149 = vshrl.u32 683565275, %v148
    %v150 = vshll.u32 683565275, %v147
    %v151 = vshrl.u32 2475754826, %v148
    %v152 = vor.u32 %v150, %v151
    %v153 = vshll.u32 2475754826, %v147
    %v154 = vshrl.u32 2131351028, %v148
    %v155 = vor.u32 %v153, %v154
    %v156 = vshll.u32 2131351028, %v147
    %v157 = vshrl.u32 2102212464, %v148
    %v158 = vor.u32 %v156, %v157
    %v159 = vshll.u32 2102212464, %v147
    %v160 = vshrl.u32 920167782, %v148
    %v161 = vor.u32 %v159, %v160
    %v162 = vshll.u32 920167782, %v147
    %v163 = vshrl.u32 1326507024, %v148
    %v164 = vor.u32 %v162, %v163
    %vm165 = vcmp.lt.s32.totalorder %v146, 1
    %vm166 = vcmp.lt.s32.totalorder %v146, 2
    %vm167 = vcmp.lt.s32.totalorder %v146, 3
    %vm168 = vcmp.lt.s32.totalorder %v146, 4
    %v169 = vsel %vm165, %v149, %v152
    %v170 = vsel %vm168, %v158, 2102212464
    %v171 = vsel %vm167, %v155, %v170
    %v172 = vsel %vm166, %v169, %v171
    %v173 = vsel %vm165, %v152, %v155
    %v174 = vsel %vm168, %v161, 920167782
    %v175 = vsel %vm167, %v158, %v174
    %v176 = vsel %vm166, %v173, %v175
    %v177 = vsel %vm165, %v155, %v158
    %v178 = vsel %vm168, %v164, 1326507024
    %v179 = vsel %vm167, %v161, %v178
    %v180 = vsel %vm166, %v177, %v179
    %v181 = vshll.u32 %v141, 8
    %v182 = vmul.u32.u64.compose %v181, %v180
    %v183 = vextract.low.u32 %v182
    %v184 = vextract.high.u32 %v182
    %v185 = vmul.u32.u64.compose %v181, %v176
    %v186 = vextract.low.u32 %v185
    %v187 = vextract.high.u32 %v185
    %v188 = vmul.u32 %v181, %v172
    %v189 = vadd.s32 %v184, %v186
    %vm190 = vc.u32 %v184, %v186
    %v191 = vadd.s32 %v187, 1
    %v192 = vsel %vm190, %v191, %v187
    %v193 = vadd.s32 %v188, %v192
    %v194 = vadd.s32 %v193, 536870912
    %v195 = vshrl.u32 %v194, 30
    %v196 = vshll.u32 %v195, 30
    %v197 = vsub.s32 %v193, %v196
    %vm198 = vcmp.lt.s32.totalorder %v197, 0
    %v199 = vsub.s32 0, %v197
    %v200 = vsel %vm198, %v199, %v197
    %v201 = vclz %v200
    %v202 = vsub.s32 %v201, 2
    %vm203 = vcmp.gt.s32.totalorder 0, %v202
    %v204 = vsel %vm203, 0, %v202
    %v205 = vsub.s32 32, %v204
    %v206 = vshll.u32 %v197, %v204
    %v207 = vshrl.u32 %v189, %v205
    %v208 = vor.u32 %v206, %v207
    %v209 = vsub.s32 4294967266, %v204
    %v210 = vadd.s32 %v209, 127
    %v211 = vshll.u32 %v210, 23
    %v212 = vor.u32 4788187, %v211
    %v213 = vand.u32 2147483647, %v212
    %v215 = vcvt.s32.f32 %v208
    %v216 = vmul.f32 %v215, %v213
    %v217 = vxor.u32 %v216, 2147483648
    %v218 = vsel %vm135, %v217, %v216
    %v219 = vsub.s32 4, %v195
    %v220 = vsel %vm135, %v219, %v195
    %v221 = vsel %vm134, %v29, %v218
    %v222 = vsel %vm134, 0, %v220
    %v223 = vcosq.f32.pop %v221
    %v224 = vsinq.f32.pop %v221
    %vm225 = vweird.f32 %v29
    %v226 = vadd.s32 %v222, 3
    %v227 = vand.u32 %v226, 3
    %vm228 = vcmp.lt.s32.totalorder %v227, 2
    %vm229 = vcmp.eq.s32.totalorder %v227, 0
    %v230 = vxor.u32 %v224, 2147483648
    %v231 = vsel %vm229, %v223, %v230
    %vm232 = vcmp.eq.s32.totalorder %v227, 2
    %v233 = vxor.u32 %v223, 2147483648
    %v234 = vsel %vm232, %v233, %v224
    %v235 = vsel %vm228, %v231, %v234
    %v236 = vsel %vm225, nan, %v235
    %v237 = vpack.c.bf16 %v132, %v132
    %v238 = vld [vmem:[%s2] sm:$0xf]
    %v239 = vld [vmem:[%s2 + $0x4] sm:$0xf]
    %v240 = vld [vmem:[%s2 + $0x8] sm:$0xf]
    %v241 = vld [vmem:[%s2 + $0xc] sm:$0xf]
    %v242 = vld [vmem:[%s2 + $0x10] sm:$0xf]
    %v243 = vld [vmem:[%s2 + $0x14] sm:$0xf]
    %v244 = vld [vmem:[%s2 + $0x18] sm:$0xf]
    %v245 = vld [vmem:[%s2 + $0x1c] sm:$0xf]
    %v246 = vld [vmem:[%s2 + $0x20] sm:$0xf]
    %v247 = vld [vmem:[%s2 + $0x24] sm:$0xf]
    %v248 = vld [vmem:[%s2 + $0x28] sm:$0xf]
    %v249 = vld [vmem:[%s2 + $0x2c] sm:$0xf]
    %v250 = vld [vmem:[%s2 + $0x30] sm:$0xf]
    %v251 = vld [vmem:[%s2 + $0x34] sm:$0xf]
    %v252 = vld [vmem:[%s2 + $0x38] sm:$0xf]
    %v253 = vld [vmem:[%s2 + $0x3c] sm:$0xf]
    %v254 = vpack.c.bf16 %v236, %v236
    %v255 = vld [vmem:[%s2 + $0x40] sm:$0xf]
    %v256 = vld [vmem:[%s2 + $0x44] sm:$0xf]
    %v257 = vld [vmem:[%s2 + $0x48] sm:$0xf]
    %v258 = vld [vmem:[%s2 + $0x4c] sm:$0xf]
    %v259 = vld [vmem:[%s2 + $0x50] sm:$0xf]
    %v260 = vld [vmem:[%s2 + $0x54] sm:$0xf]
    %v261 = vld [vmem:[%s2 + $0x58] sm:$0xf]
    %v262 = vld [vmem:[%s2 + $0x5c] sm:$0xf]
    %v263 = vld [vmem:[%s2 + $0x60] sm:$0xf]
    %v264 = vld [vmem:[%s2 + $0x64] sm:$0xf]
    %v265 = vld [vmem:[%s2 + $0x68] sm:$0xf]
    %v266 = vld [vmem:[%s2 + $0x6c] sm:$0xf]
    %v267 = vld [vmem:[%s2 + $0x70] sm:$0xf]
    %v268 = vld [vmem:[%s2 + $0x74] sm:$0xf]
    %v269 = vld [vmem:[%s2 + $0x78] sm:$0xf]
    %v270 = vld [vmem:[%s2 + $0x7c] sm:$0xf]
    %v287 = vunpack.c.l.b16 %v255
    %v288 = vunpack.c.l.b16 %v256
    %v289 = vunpack.c.l.b16 %v257
    %v290 = vunpack.c.l.b16 %v258
    %v291 = vunpack.c.l.b16 %v259
    %v292 = vunpack.c.l.b16 %v260
    %v293 = vunpack.c.l.b16 %v261
    %v294 = vunpack.c.l.b16 %v262
    %v295 = vunpack.c.l.b16 %v263
    %v296 = vunpack.c.l.b16 %v264
    %v297 = vunpack.c.l.b16 %v265
    %v298 = vunpack.c.l.b16 %v266
    %v299 = vunpack.c.l.b16 %v267
    %v300 = vunpack.c.l.b16 %v268
    %v301 = vunpack.c.l.b16 %v269
    %v302 = vunpack.c.l.b16 %v270
    %v303 = vpack.c.b16 %v288, %v287
    %v304 = vpack.c.b16 %v290, %v289
    %v305 = vpack.c.b16 %v292, %v291
    %v306 = vpack.c.b16 %v294, %v293
    %v307 = vpack.c.b16 %v296, %v295
    %v308 = vpack.c.b16 %v298, %v297
    %v309 = vpack.c.b16 %v300, %v299
    %v310 = vpack.c.b16 %v302, %v301
    %319 = vmatprep.subr.bf16.mxu0 0
    %320 = vmatpush1.bf16.msra.mxu0 %v303
    %321 = vmatprep.subr.bf16.mxu0 0
    %322 = vmatpush1.bf16.msra.mxu0 %v304
    %323 = vmatprep.subr.bf16.mxu0 0
    %324 = vmatpush1.bf16.msra.mxu0 %v305
    %325 = vmatprep.subr.bf16.mxu0 0
    %326 = vmatpush1.bf16.msra.mxu0 %v306
    %327 = vmatprep.subr.bf16.mxu0 0
    %328 = vmatpush1.bf16.msra.mxu0 %v307
    %329 = vmatprep.subr.bf16.mxu0 0
    %330 = vmatpush1.bf16.msra.mxu0 %v308
    %331 = vmatprep.subr.bf16.mxu0 0
    %332 = vmatpush1.bf16.msra.mxu0 %v309
    %333 = vmatprep.subr.bf16.mxu0 0
    %334 = vmatpush1.bf16.msra.mxu0 %v310
    %335 = vmatprep.subr.bf16.mxu0 0
    %336 = vmatpush1.bf16.msra.mxu0 0
    %337 = vmatprep.subr.bf16.mxu0 0
    %338 = vmatpush1.bf16.msra.mxu0 0
    %339 = vmatprep.subr.bf16.mxu0 0
    %340 = vmatpush1.bf16.msra.mxu0 0
    %341 = vmatprep.subr.bf16.mxu0 0
    %342 = vmatpush1.bf16.msra.mxu0 0
    %343 = vmatprep.subr.bf16.mxu0 0
    %344 = vmatpush1.bf16.msra.mxu0 0
    %345 = vmatprep.subr.bf16.mxu0 0
    %346 = vmatpush1.bf16.msra.mxu0 0
    %347 = vmatprep.subr.bf16.mxu0 0
    %348 = vmatpush1.bf16.msra.mxu0 0
    %349 = vmatprep.subr.bf16.mxu0 0
    %350 = vmatpush1.bf16.msra.mxu0 0
    %351 = vmatprep.mubr.bf16.mxu0 0
    %352 = vmatmul.mubr.bf16.gmra.mrb[0].mxu0 %v254
    %v353 = vpop.f32.mrb[0].mxu0
    %v354 = vadd.f32 0.0, %v353
    %v355 = vpop.f32.mrb[0].mxu0
    %v356 = vpop.f32.mrb[0].mxu0
    %v357 = vpop.f32.mrb[0].mxu0
    %358 = vdwg.mxu0
    %v375 = vunpack.c.l.b16 %v238
    %v376 = vunpack.c.l.b16 %v239
    %v377 = vunpack.c.l.b16 %v240
    %v378 = vunpack.c.l.b16 %v241
    %v379 = vunpack.c.l.b16 %v242
    %v380 = vunpack.c.l.b16 %v243
    %v381 = vunpack.c.l.b16 %v244
    %v382 = vunpack.c.l.b16 %v245
    %v383 = vunpack.c.l.b16 %v246
    %v384 = vunpack.c.l.b16 %v247
    %v385 = vunpack.c.l.b16 %v248
    %v386 = vunpack.c.l.b16 %v249
    %v387 = vunpack.c.l.b16 %v250
    %v388 = vunpack.c.l.b16 %v251
    %v389 = vunpack.c.l.b16 %v252
    %v390 = vunpack.c.l.b16 %v253
    %v391 = vpack.c.b16 %v376, %v375
    %v392 = vpack.c.b16 %v378, %v377
    %v393 = vpack.c.b16 %v380, %v379
    %v394 = vpack.c.b16 %v382, %v381
    %v395 = vpack.c.b16 %v384, %v383
    %v396 = vpack.c.b16 %v386, %v385
    %v397 = vpack.c.b16 %v388, %v387
    %v398 = vpack.c.b16 %v390, %v389
    %407 = vmatprep.subr.bf16.mxu0 0
    %408 = vmatpush1.bf16.msra.mxu0 %v391
    %409 = vmatprep.subr.bf16.mxu0 0
    %410 = vmatpush1.bf16.msra.mxu0 %v392
    %411 = vmatprep.subr.bf16.mxu0 0
    %412 = vmatpush1.bf16.msra.mxu0 %v393
    %413 = vmatprep.subr.bf16.mxu0 0
    %414 = vmatpush1.bf16.msra.mxu0 %v394
    %415 = vmatprep.subr.bf16.mxu0 0
    %416 = vmatpush1.bf16.msra.mxu0 %v395
    %417 = vmatprep.subr.bf16.mxu0 0
    %418 = vmatpush1.bf16.msra.mxu0 %v396
    %419 = vmatprep.subr.bf16.mxu0 0
    %420 = vmatpush1.bf16.msra.mxu0 %v397
    %421 = vmatprep.subr.bf16.mxu0 0
    %422 = vmatpush1.bf16.msra.mxu0 %v398
    %423 = vmatprep.subr.bf16.mxu0 0
    %424 = vmatpush1.bf16.msra.mxu0 0
    %425 = vmatprep.subr.bf16.mxu0 0
    %426 = vmatpush1.bf16.msra.mxu0 0
    %427 = vmatprep.subr.bf16.mxu0 0
    %428 = vmatpush1.bf16.msra.mxu0 0
    %429 = vmatprep.subr.bf16.mxu0 0
    %430 = vmatpush1.bf16.msra.mxu0 0
    %431 = vmatprep.subr.bf16.mxu0 0
    %432 = vmatpush1.bf16.msra.mxu0 0
    %433 = vmatprep.subr.bf16.mxu0 0
    %434 = vmatpush1.bf16.msra.mxu0 0
    %435 = vmatprep.subr.bf16.mxu0 0
    %436 = vmatpush1.bf16.msra.mxu0 0
    %437 = vmatprep.subr.bf16.mxu0 0
    %438 = vmatpush1.bf16.msra.mxu0 0
    %439 = vmatprep.mubr.bf16.mxu0 0
    %440 = vmatmul.mubr.bf16.gmra.mrb[0].mxu0 %v237
    %v441 = vpop.f32.mrb[0].mxu0
    %v442 = vadd.f32 %v354, %v441
    %v443 = vpop.f32.mrb[0].mxu0
    %v444 = vpop.f32.mrb[0].mxu0
    %v445 = vpop.f32.mrb[0].mxu0
    %446 = vdwg.mxu0
    %v447 = vlaneseq
    %v448 = vshrl.u32 %v447, 7
    %v449 = vsub.s32 0, %v448
    %v450 = vrot.slane %v17, %v449
    %v451 = vadd.f32 %v442, %v450
    %v452 = vxor.u32 %v451, 2147483648
    %v453 = vmul.f32 %v452, 1.442695
    %v454 = vpow.pop %v453
    %v455 = vadd.f32 %v454, 1.0
    %v456 = vrcp.pop %v455
    %v457 = vmul.f32 1.0, %v456
    %v458 = vmul.f32 %v451, %v457
    %v459 = vpack.c.bf16 %v458, %v458
    %v460 = vld [vmem:[%s2 + $0x80] sm:$0xf]
    %v461 = vld [vmem:[%s2 + $0x84] sm:$0xf]
    %v462 = vld [vmem:[%s2 + $0x88] sm:$0xf]
    %v463 = vld [vmem:[%s2 + $0x8c] sm:$0xf]
    %v464 = vlaneseq
    %v465 = vshrl.u32 %v464, 7
    %v466 = vsub.s32 0, %v465
    %v467 = vrot.slane %v18, %v466
    %v472 = vunpack.c.l.b16 %v460
    %v473 = vunpack.c.l.b16 %v461
    %v474 = vunpack.c.l.b16 %v462
    %v475 = vunpack.c.l.b16 %v463
    %v476 = vpack.c.b16 %v473, %v472
    %v477 = vpack.c.b16 %v475, %v474
    %vm480 = vcmask 261120
    %v482 = vsel %vm480, %v459, 0
    %484 = vmatprep.subr.bf16.mxu0 0
    %485 = vmatpush1.bf16.msra.mxu0 %v476
    %486 = vmatprep.subr.bf16.mxu0 0
    %487 = vmatpush1.bf16.msra.mxu0 %v477
    %488 = vmatprep.subr.bf16.mxu0 0
    %489 = vmatpush1.bf16.msra.mxu0 0
    %490 = vmatprep.subr.bf16.mxu0 0
    %491 = vmatpush1.bf16.msra.mxu0 0
    %492 = vmatprep.subr.bf16.mxu0 0
    %493 = vmatpush1.bf16.msra.mxu0 0
    %494 = vmatprep.subr.bf16.mxu0 0
    %495 = vmatpush1.bf16.msra.mxu0 0
    %496 = vmatprep.subr.bf16.mxu0 0
    %497 = vmatpush1.bf16.msra.mxu0 0
    %498 = vmatprep.subr.bf16.mxu0 0
    %499 = vmatpush1.bf16.msra.mxu0 0
    %500 = vmatprep.subr.bf16.mxu0 0
    %501 = vmatpush1.bf16.msra.mxu0 0
    %502 = vmatprep.subr.bf16.mxu0 0
    %503 = vmatpush1.bf16.msra.mxu0 0
    %504 = vmatprep.subr.bf16.mxu0 0
    %505 = vmatpush1.bf16.msra.mxu0 0
    %506 = vmatprep.subr.bf16.mxu0 0
    %507 = vmatpush1.bf16.msra.mxu0 0
    %508 = vmatprep.subr.bf16.mxu0 0
    %509 = vmatpush1.bf16.msra.mxu0 0
    %510 = vmatprep.subr.bf16.mxu0 0
    %511 = vmatpush1.bf16.msra.mxu0 0
    %512 = vmatprep.subr.bf16.mxu0 0
    %513 = vmatpush1.bf16.msra.mxu0 0
    %514 = vmatprep.subr.bf16.mxu0 0
    %515 = vmatpush1.bf16.msra.mxu0 0
    %516 = vmatprep.mubr.bf16.mxu0 0
    %517 = vmatmul.mubr.bf16.gmra.mrb[0].mxu0 %v482
    %v518 = vpop.f32.mrb[0].mxu0
    %v519 = vadd.f32 %v467, %v518
    %v520 = vpop.f32.mrb[0].mxu0
    %v521 = vpop.f32.mrb[0].mxu0
    %v522 = vpop.f32.mrb[0].mxu0
    %523 = vdwg.mxu0
    %vm524 = vcmask 257024
    %525 = vst.msk [vmem:[#allocation2] sm:$0xf] %vm524, %v519
    // Predicated region
    $region14: #{tpu_custom_call.1} parent=1 // pred_check
      _
    $region15: #{tpu_custom_call.1} parent=1 // pred_check_branch
      %527 = sbr.rel (0) target = $region17
    $region16: #{tpu_custom_call.1} parent=1 // pred_region
      %s529 = ssub.s32 64, 64
      %530 = vsyncadd [#allocation3], %s529
      %s532 = sshll.u32 [#allocation2], 4
      %s533 = int_to_ptr.vmem [resolvable:$true] %s532
      %535 = dma.vmem_to_hbm [thread:$0]  %s533, 64, %s3, [#allocation3]
    $region17: #{tpu_custom_call.1} parent=1 // pred_fallthru
      _
    // Predicated region
    $region18: #{tpu_custom_call.1} parent=1 // pred_check
      _
    $region19: #{tpu_custom_call.1} parent=1 // pred_check_branch
      %537 = sbr.rel (0) target = $region21
    $region20: #{tpu_custom_call.1} parent=1 // pred_region
      %538 = dma.done [#allocation3], 64
    $region21: #{tpu_custom_call.1} parent=1 // pred_fallthru
      _
    %539 = vsyncpa [#allocation3], 1

</llo_original>
